<compile_context>
chip_gen: v5e
topology: v5e:2x2
jax: 0.10.0
libtpu: 0.0.40
codegen_flags: <defaults>
</compile_context>

<pallas_src>
import jax
import jax.numpy as jnp
from jax import lax
from jax.experimental import pallas as pl
from jax.experimental.pallas import tpu as pltpu

HIDDEN = 128


def _round_up(x, m):
    return ((x + m - 1) // m) * m


def critic_kernel(s_ref, a_ref, w1s_ref, w1a_ref, b1_ref, w2row_ref, b2_ref, o_ref):
    # s: [TB, Ds], a: [TB, Da], w1s: [Ds, 128], w1a: [Da, 128], b1: [1, 128]
    # w2row: [1, 128], b2 (SMEM): [1], o: [1, 1, TB]
    h = (
        jnp.dot(s_ref[...], w1s_ref[...], preferred_element_type=jnp.float32)
        + jnp.dot(a_ref[...], w1a_ref[...], preferred_element_type=jnp.float32)
        + b1_ref[...]
    )
    h = jnp.maximum(h, 0.0)  # relu, f32 accumulator

    # N=1 output projection as an MXU contraction: [1,128] x [TB,128]^T -> [1,TB].
    # Result is already lane-dense (batch on the lane axis) -> unmasked store,
    # no XLU cross-lane reduce, no sublane->lane transpose.
    q = lax.dot_general(
        w2row_ref[...], h,
        dimension_numbers=(((1,), (1,)), ((), ())),
        preferred_element_type=jnp.float32,
    )                                                   # [1, TB]
    o_ref[...] = (q + b2_ref[0])[None].astype(o_ref.dtype)   # [1, 1, TB]


def _choose_tb(B):
    cap = 4096
    if B >= 256:
        # >= 2 tiles so the "parallel" batch axis can shard across v7x's 2 TCs.
        return min(cap, _round_up(pl.cdiv(B, 2), 128))
    if B >= 128:
        return min(cap, _round_up(B, 128))
    return _round_up(max(B, 8), 8)


def critic_forward(state, action, params, *, tb=None, use_bf16=False):
    """Pallas implementation of Critic.forward(state, action) -> [B, 1]."""
    w1, b1, w2, b2 = params

    B, sd = state.shape
    _, ad = action.shape

    # Fused-concat trick: split the first-layer weight by input segment.
    w1_s = w1[:sd]                          # [sd, 128]
    w1_a = w1[sd:]                          # [ad, 128]
    b1_row = b1.reshape(1, HIDDEN).astype(jnp.float32)
    w2_row = w2.reshape(1, HIDDEN).astype(jnp.float32)   # == w2.T
    b2_s = b2.reshape(1).astype(jnp.float32)             # SMEM scalar

    in_dt = jnp.bfloat16 if use_bf16 else jnp.float32
    state = state.astype(in_dt)
    action = action.astype(in_dt)
    w1_s = w1_s.astype(in_dt)
    w1_a = w1_a.astype(in_dt)

    # Batch tile selection (lane-dense output: multiple of 128 when possible).
    if tb is None:
        tb = _choose_tb(B)
    else:
        tb = max(8, (tb // 8) * 8)

    B_pad = _round_up(B, tb)
    if B_pad != B:
        pad = B_pad - B
        state = jnp.pad(state, ((0, pad), (0, 0)))
        action = jnp.pad(action, ((0, pad), (0, 0)))
    num_tiles = B_pad // tb

    out = pl.pallas_call(
        critic_kernel,
        out_shape=jax.ShapeDtypeStruct((num_tiles, 1, tb), jnp.float32),
        grid=(num_tiles,),
        in_specs=[
            pl.BlockSpec((tb, sd), lambda i: (i, 0)),           # state tile
            pl.BlockSpec((tb, ad), lambda i: (i, 0)),           # action tile
            pl.BlockSpec((sd, HIDDEN), lambda i: (0, 0)),       # w1_s (resident)
            pl.BlockSpec((ad, HIDDEN), lambda i: (0, 0)),       # w1_a (resident)
            pl.BlockSpec((1, HIDDEN), lambda i: (0, 0)),        # b1   (resident)
            pl.BlockSpec((1, HIDDEN), lambda i: (0, 0)),        # w2 row (resident)
            pl.BlockSpec(memory_space=pltpu.MemorySpace.SMEM),  # b2 scalar
        ],
        out_specs=pl.BlockSpec((1, 1, tb), lambda i: (i, 0, 0)),
        compiler_params=pltpu.CompilerParams(
            dimension_semantics=("parallel",),     # shard batch tiles across TCs (v7x)
            vmem_limit_bytes=32 * 1024 * 1024,     # ample on v5e/v6e/v7x
        ),
    )(state, action, w1_s, w1_a, b1_row, w2_row, b2_s)

    # Lane-dense tiles -> [B, 1] (drop padded rows — keep this slice if tb changes).
    return out.reshape(-1)[:B].reshape(B, 1)


def init_critic_params(key, input_dim):
    """Deterministic init matching nn.Linear default: U(-1/sqrt(fan_in), 1/sqrt(fan_in))."""
    k1, k2, k3, k4 = jax.random.split(key, 4)
    bound1 = 1.0 / jnp.sqrt(jnp.float32(input_dim))
    bound2 = 1.0 / jnp.sqrt(jnp.float32(HIDDEN))
    w1 = jax.random.uniform(k1, (input_dim, HIDDEN), jnp.float32, -bound1, bound1)
    b1 = jax.random.uniform(k2, (1, HIDDEN), jnp.float32, -bound1, bound1)
    w2 = jax.random.uniform(k3, (HIDDEN, 1), jnp.float32, -bound2, bound2)
    b2 = jax.random.uniform(k4, (1, 1), jnp.float32, -bound2, bound2)
    return (w1, b1, w2, b2)


def critic_reference(state, action, params):
    """Pure-JAX reference matching the PyTorch forward pass exactly."""
    w1, b1, w2, b2 = params
    x = jnp.concatenate([state, action], axis=-1)
    h = jnp.maximum(x @ w1 + b1, 0.0)
    return h @ w2 + b2


if __name__ == "__main__":
    key = jax.random.PRNGKey(0)
    k_state, k_action, k_params, k_s2, k_a2, k_s3, k_a3 = jax.random.split(key, 7)

    state_dim, action_dim = 24, 8
    input_dim = state_dim + action_dim
    params = init_critic_params(k_params, input_dim)

    # Case 1: toy batch (single small tile, full-array block on the lane axis).
    B = 8
    state = jax.random.normal(k_state, (B, state_dim), jnp.float32)
    action = jax.random.normal(k_action, (B, action_dim), jnp.float32)
    out = jax.block_until_ready(critic_forward(state, action, params))
    ref = critic_reference(state, action, params)
    assert out.shape == (B, 1), out.shape
    assert jnp.allclose(out, ref, atol=1e-4, rtol=1e-4), "mismatch vs reference (case 1)"

    # Case 2: explicit small tile -> multi-tile grid + batch padding.
    B2 = 40
    state2 = jax.random.normal(k_s2, (B2, state_dim), jnp.float32)
    action2 = jax.random.normal(k_a2, (B2, action_dim), jnp.float32)
    out2 = jax.block_until_ready(critic_forward(state2, action2, params, tb=16))
    ref2 = critic_reference(state2, action2, params)
    assert out2.shape == (B2, 1), out2.shape
    assert jnp.allclose(out2, ref2, atol=1e-4, rtol=1e-4), "mismatch vs reference (case 2)"

    # Case 3: default tb selection — 128-multiple lane-dense tiles, >=2 tiles, padding.
    B3 = 300
    state3 = jax.random.normal(k_s3, (B3, state_dim), jnp.float32)
    action3 = jax.random.normal(k_a3, (B3, action_dim), jnp.float32)
    out3 = jax.block_until_ready(critic_forward(state3, action3, params))
    ref3 = critic_reference(state3, action3, params)
    assert out3.shape == (B3, 1), out3.shape
    assert jnp.allclose(out3, ref3, atol=1e-4, rtol=1e-4), "mismatch vs reference (case 3)"

    # Case 4: bf16-input knob (looser tolerance; f32 accumulation).
    out4 = jax.block_until_ready(critic_forward(state3, action3, params, use_bf16=True))
    assert jnp.allclose(out4, ref3, atol=5e-2, rtol=5e-2), "mismatch vs reference (case 4)"

    print("KERNEL_OK")
</pallas_src>

<mosaic_0001>
module attributes {stable_mosaic.version = 11 : i64} {
  func.func @critic_kernel(%arg0: i32, %arg1: memref<8x24xf32, #tpu.memory_space<vmem>>, %arg2: memref<8x8xf32, #tpu.memory_space<vmem>>, %arg3: memref<24x128xf32, #tpu.memory_space<vmem>>, %arg4: memref<8x128xf32, #tpu.memory_space<vmem>>, %arg5: memref<1x128xf32, #tpu.memory_space<vmem>>, %arg6: memref<1x128xf32, #tpu.memory_space<vmem>>, %arg7: memref<1xf32, #tpu.memory_space<smem>>, %arg8: memref<1x1x8xf32, #tpu.memory_space<vmem>>) attributes {dimension_semantics = [#tpu.dimension_semantics<parallel>], iteration_bounds = array<i64: 1>, scalar_prefetch = 0 : i64, scratch_operands = 0 : i64, tpu.core_type = #tpu.core_type<tc>, window_params = [{transform_indices = @transform_0, window_bounds = array<i64: 8, 24>}, {transform_indices = @transform_1, window_bounds = array<i64: 8, 8>}, {pipeline_mode = #tpu.pipeline_mode<synchronous>, transform_indices = @transform_2, window_bounds = array<i64: 24, 128>}, {pipeline_mode = #tpu.pipeline_mode<synchronous>, transform_indices = @transform_3, window_bounds = array<i64: 8, 128>}, {pipeline_mode = #tpu.pipeline_mode<synchronous>, transform_indices = @transform_4, window_bounds = array<i64: 1, 128>}, {pipeline_mode = #tpu.pipeline_mode<synchronous>, transform_indices = @transform_5, window_bounds = array<i64: 1, 128>}, {transform_indices = @transform_6, window_bounds = array<i64: 1>}, {transform_indices = @transform_7, window_bounds = array<i64: 1, 1, 8>}]} {
    %c0 = arith.constant 0 : index
    %c0_0 = arith.constant 0 : index
    %0 = vector.load %arg1[%c0, %c0_0] : memref<8x24xf32, #tpu.memory_space<vmem>>, vector<8x24xf32>
    %c0_1 = arith.constant 0 : index
    %c0_2 = arith.constant 0 : index
    %1 = vector.load %arg3[%c0_1, %c0_2] : memref<24x128xf32, #tpu.memory_space<vmem>>, vector<24x128xf32>
    %cst = arith.constant dense<0.000000e+00> : vector<8x128xf32>
    %2 = tpu.matmul %0, %1, %cst {dimension_numbers = #tpu.dot_dimension_numbers<[1], [0], [0], [1], [0, 0, 1, 1], [], []>} : vector<8x24xf32>, vector<24x128xf32>, vector<8x128xf32> -> vector<8x128xf32>
    %c0_3 = arith.constant 0 : index
    %c0_4 = arith.constant 0 : index
    %3 = vector.load %arg2[%c0_3, %c0_4] : memref<8x8xf32, #tpu.memory_space<vmem>>, vector<8x8xf32>
    %c0_5 = arith.constant 0 : index
    %c0_6 = arith.constant 0 : index
    %4 = vector.load %arg4[%c0_5, %c0_6] : memref<8x128xf32, #tpu.memory_space<vmem>>, vector<8x128xf32>
    %cst_7 = arith.constant dense<0.000000e+00> : vector<8x128xf32>
    %5 = tpu.matmul %3, %4, %cst_7 {dimension_numbers = #tpu.dot_dimension_numbers<[1], [0], [0], [1], [0, 0, 1, 1], [], []>} : vector<8x8xf32>, vector<8x128xf32>, vector<8x128xf32> -> vector<8x128xf32>
    %6 = arith.addf %2, %5 : vector<8x128xf32>
    %c0_8 = arith.constant 0 : index
    %c0_9 = arith.constant 0 : index
    %7 = vector.load %arg5[%c0_8, %c0_9] : memref<1x128xf32, #tpu.memory_space<vmem>>, vector<1x128xf32>
    %8 = vector.broadcast %7 : vector<1x128xf32> to vector<8x128xf32>
    %9 = arith.addf %6, %8 : vector<8x128xf32>
    %cst_10 = arith.constant 0.000000e+00 : f32
    %10 = vector.broadcast %cst_10 : f32 to vector<8x128xf32>
    %11 = arith.maximumf %9, %10 : vector<8x128xf32>
    %c0_11 = arith.constant 0 : index
    %c0_12 = arith.constant 0 : index
    %12 = vector.load %arg6[%c0_11, %c0_12] : memref<1x128xf32, #tpu.memory_space<vmem>>, vector<1x128xf32>
    %cst_13 = arith.constant dense<0.000000e+00> : vector<1x8xf32>
    %13 = tpu.matmul %12, %11, %cst_13 {dimension_numbers = #tpu.dot_dimension_numbers<[1], [1], [0], [0], [0, 0, 1, 0], [], []>} : vector<1x128xf32>, vector<8x128xf32>, vector<1x8xf32> -> vector<1x8xf32>
    %c0_14 = arith.constant 0 : index
    %14 = memref.load %arg7[%c0_14] : memref<1xf32, #tpu.memory_space<smem>>
    %15 = vector.broadcast %14 : f32 to vector<1x8xf32>
    %16 = arith.addf %13, %15 : vector<1x8xf32>
    %17 = vector.shape_cast %16 : vector<1x8xf32> to vector<1x1x8xf32>
    %c0_15 = arith.constant 0 : index
    %c0_16 = arith.constant 0 : index
    %c0_17 = arith.constant 0 : index
    %18 = vector.load %arg8[%c0_15, %c0_16, %c0_17] : memref<1x1x8xf32, #tpu.memory_space<vmem>>, vector<1x1x8xf32>
    tpu.vector_store %arg8[%c0_15, %c0_16, %c0_17], %17 {strides = array<i32>} : memref<1x1x8xf32, #tpu.memory_space<vmem>>, vector<1x1x8xf32>,
    return
  }
  func.func @transform_0(%arg0: i32) -> (i32, i32) {
    %c0_i32 = arith.constant 0 : i32
    %c0_i32_0 = arith.constant 0 : i32
    return %arg0, %c0_i32 : i32, i32
  }
  func.func @transform_1(%arg0: i32) -> (i32, i32) {
    %c0_i32 = arith.constant 0 : i32
    %c0_i32_0 = arith.constant 0 : i32
    return %arg0, %c0_i32 : i32, i32
  }
  func.func @transform_2(%arg0: i32) -> (i32, i32) {
    %c0_i32 = arith.constant 0 : i32
    %c0_i32_0 = arith.constant 0 : i32
    %c0_i32_1 = arith.constant 0 : i32
    return %c0_i32, %c0_i32_0 : i32, i32
  }
  func.func @transform_3(%arg0: i32) -> (i32, i32) {
    %c0_i32 = arith.constant 0 : i32
    %c0_i32_0 = arith.constant 0 : i32
    %c0_i32_1 = arith.constant 0 : i32
    return %c0_i32, %c0_i32_0 : i32, i32
  }
  func.func @transform_4(%arg0: i32) -> (i32, i32) {
    %c0_i32 = arith.constant 0 : i32
    %c0_i32_0 = arith.constant 0 : i32
    %c0_i32_1 = arith.constant 0 : i32
    return %c0_i32, %c0_i32_0 : i32, i32
  }
  func.func @transform_5(%arg0: i32) -> (i32, i32) {
    %c0_i32 = arith.constant 0 : i32
    %c0_i32_0 = arith.constant 0 : i32
    %c0_i32_1 = arith.constant 0 : i32
    return %c0_i32, %c0_i32_0 : i32, i32
  }
  func.func @transform_6(%arg0: i32) -> i32 {
    %c0_i32 = arith.constant 0 : i32
    %c0_i32_0 = arith.constant 0 : i32
    return %c0_i32 : i32
  }
  func.func @transform_7(%arg0: i32) -> (i32, i32, i32) {
    %c0_i32 = arith.constant 0 : i32
    %c0_i32_0 = arith.constant 0 : i32
    %c0_i32_1 = arith.constant 0 : i32
    return %arg0, %c0_i32, %c0_i32_0 : i32, i32, i32
  }
}

</mosaic_0001>

<llo_original>
// kernel: tpu_custom_call.1
$region0: #{tpu_custom_call.1}
  #allocation0 [shape = 'u32[]', space=smem, size = 0x4, offset = 0x4, fixed_abs, tag = 'smem constant byte address 0x4 - core index']
  #allocation1 [shape = 'u32[72,128]{1,0:T(1,128)}', space=vmem, size = 0x9000, scoped, tag = 'internal scratch']
  #allocation2 [shape = 'f32[1]{0:T(128)S(6)}', space=smem, size = 0x200, scoped, tag = 'scoped memory for tpu_custom_call.1']
  %s0 = inlined_call_operand.hbm [shape: f32[8,24], index: 0, kind: input, shape index: {}]
  %s1 = inlined_call_operand.hbm [shape: f32[8,8], index: 1, kind: input, shape index: {}]
  %s2 = inlined_call_operand.hbm [shape: f32[24,128], index: 2, kind: input, shape index: {}]
  %s3 = inlined_call_operand.hbm [shape: f32[8,128], index: 3, kind: input, shape index: {}]
  %s4 = inlined_call_operand.vmem [shape: f32[1,128], index: 4, kind: input, shape index: {}]
  %s5 = inlined_call_operand.vmem [shape: f32[1,128], index: 5, kind: input, shape index: {}]
  %s6 = inlined_call_operand.<no memory space> [shape: f32[1], index: 6, kind: input, shape index: {}]
  %s7 = inlined_call_operand.hbm [shape: f32[1,1,8], index: 7, kind: output, shape index: {}]
  %s8 = sld [smem:[#allocation0]]
  $region54: #{tpu_custom_call.1} parent=0
    _
  %s10 = ssub.s32 1, %s8
  %s11 = scalar_select 0, %s10, %s8
  %12 = sst [smem:[#allocation2]] %s6
  $region1: #{tpu_custom_call.1} parent=0
    #allocation3 [shape = 'u8[4096]{0}', space=vmem, size = 0x1000, scoped, tag = 'input window, operand 0, single buffered']
    #allocation4 [shape = 's32[1]{0}', space=sflag, size = 0x4, scoped, tag = 'scoped memory for tpu_custom_call.1']
    #allocation5 [shape = 's32[1]{0}', space=sflag, size = 0x4, scoped, tag = 'scoped memory for tpu_custom_call.1']
    #allocation6 [shape = 'u8[4096]{0}', space=vmem, size = 0x1000, scoped, tag = 'input window, operand 1, single buffered']
    #allocation7 [shape = 's32[1]{0}', space=sflag, size = 0x4, scoped, tag = 'scoped memory for tpu_custom_call.1']
    #allocation8 [shape = 'u8[12288]{0}', space=vmem, size = 0x3000, scoped, tag = 'input window, operand 2, single buffered']
    #allocation9 [shape = 'u8[4096]{0}', space=vmem, size = 0x1000, scoped, tag = 'input window, operand 3, single buffered']
    #allocation10 [shape = 's32[1]{0}', space=sflag, size = 0x4, scoped, tag = 'scoped memory for tpu_custom_call.1']
    #allocation11 [shape = 'u8[512]{0}', space=vmem, size = 0x400, scoped, tag = 'output window, operand 0, single buffered']
    %13 = vsyncpa [#allocation4], 0
    %14 = vsyncpa [#allocation7], 0
    %15 = vsyncpa [#allocation10], 0
    %16 = vsyncpa [#allocation5], 0
    // Predicated region
    $region2: #{tpu_custom_call.1} parent=1 // pred_check
      _
    $region3: #{tpu_custom_call.1} parent=1 // pred_check_branch
      %18 = sbr.rel (0) target = $region5
    $region4: #{tpu_custom_call.1} parent=1 // pred_region
      %20 = vsyncadd [#allocation4], 0
      %s22 = sshll.u32 %s0, 4
      %s23 = int_to_ptr.hbm [resolvable:$true] %s22
      %s24 = sshll.u32 [#allocation3], 4
      %s25 = int_to_ptr.vmem [resolvable:$true] %s24
      %27 = dma.hbm_to_vmem [thread:$0]  %s23, 128, %s25, [#allocation4]
    $region5: #{tpu_custom_call.1} parent=1 // pred_fallthru
      _
    // Predicated region
    $region6: #{tpu_custom_call.1} parent=1 // pred_check
      _
    $region7: #{tpu_custom_call.1} parent=1 // pred_check_branch
      %29 = sbr.rel (0) target = $region9
    $region8: #{tpu_custom_call.1} parent=1 // pred_region
      %31 = vsyncadd [#allocation7], 0
      %s33 = sshll.u32 %s1, 4
      %s34 = int_to_ptr.hbm [resolvable:$true] %s33
      %s35 = sshll.u32 [#allocation6], 4
      %s36 = int_to_ptr.vmem [resolvable:$true] %s35
      %38 = dma.hbm_to_vmem [thread:$0]  %s34, 128, %s36, [#allocation7]
    $region9: #{tpu_custom_call.1} parent=1 // pred_fallthru
      _
    // Predicated region
    $region10: #{tpu_custom_call.1} parent=1 // pred_check
      _
    $region11: #{tpu_custom_call.1} parent=1 // pred_check_branch
      %40 = sbr.rel (0) target = $region13
    $region12: #{tpu_custom_call.1} parent=1 // pred_region
      %42 = vsyncadd [#allocation7], 0
      %s43 = sshll.u32 %s2, 4
      %s44 = int_to_ptr.hbm [resolvable:$true] %s43
      %s45 = sshll.u32 [#allocation8], 4
      %s46 = int_to_ptr.vmem [resolvable:$true] %s45
      %51 = dma.hbm_to_vmem [thread:$0]  %s44, 384, %s46, [#allocation7], 128, 128, 8
    $region13: #{tpu_custom_call.1} parent=1 // pred_fallthru
      _
    // Predicated region
    $region14: #{tpu_custom_call.1} parent=1 // pred_check
      _
    $region15: #{tpu_custom_call.1} parent=1 // pred_check_branch
      %53 = sbr.rel (0) target = $region17
    $region16: #{tpu_custom_call.1} parent=1 // pred_region
      %55 = vsyncadd [#allocation10], 0
      %s57 = sshll.u32 %s3, 4
      %s58 = int_to_ptr.hbm [resolvable:$true] %s57
      %s59 = sshll.u32 [#allocation9], 4
      %s60 = int_to_ptr.vmem [resolvable:$true] %s59
      %62 = dma.hbm_to_vmem [thread:$0]  %s58, 128, %s60, [#allocation10]
    $region17: #{tpu_custom_call.1} parent=1 // pred_fallthru
      _
    // Predicated region
    $region18: #{tpu_custom_call.1} parent=1 // pred_check
      _
    $region19: #{tpu_custom_call.1} parent=1 // pred_check_branch
      %64 = sbr.rel (0) target = $region21
    $region20: #{tpu_custom_call.1} parent=1 // pred_region
      _
    $region21: #{tpu_custom_call.1} parent=1 // pred_fallthru
      _
    // Predicated region
    $region22: #{tpu_custom_call.1} parent=1 // pred_check
      _
    $region23: #{tpu_custom_call.1} parent=1 // pred_check_branch
      %66 = sbr.rel (0) target = $region25
    $region24: #{tpu_custom_call.1} parent=1 // pred_region
      _
    $region25: #{tpu_custom_call.1} parent=1 // pred_fallthru
      _
    // Predicated region
    $region26: #{tpu_custom_call.1} parent=1 // pred_check
      _
    $region27: #{tpu_custom_call.1} parent=1 // pred_check_branch
      %68 = sbr.rel (0) target = $region29
    $region28: #{tpu_custom_call.1} parent=1 // pred_region
      _
    $region29: #{tpu_custom_call.1} parent=1 // pred_fallthru
      _
    // Predicated region
    $region30: #{tpu_custom_call.1} parent=1 // pred_check
      _
    $region31: #{tpu_custom_call.1} parent=1 // pred_check_branch
      %70 = sbr.rel (0) target = $region33
    $region32: #{tpu_custom_call.1} parent=1 // pred_region
      %72 = dma.done [#allocation4], 128
    $region33: #{tpu_custom_call.1} parent=1 // pred_fallthru
      _
    // Predicated region
    $region34: #{tpu_custom_call.1} parent=1 // pred_check
      _
    $region35: #{tpu_custom_call.1} parent=1 // pred_check_branch
      %74 = sbr.rel (0) target = $region37
    $region36: #{tpu_custom_call.1} parent=1 // pred_region
      %76 = dma.done [#allocation7], 128
    $region37: #{tpu_custom_call.1} parent=1 // pred_fallthru
      _
    // Predicated region
    $region38: #{tpu_custom_call.1} parent=1 // pred_check
      _
    $region39: #{tpu_custom_call.1} parent=1 // pred_check_branch
      %78 = sbr.rel (0) target = $region41
    $region40: #{tpu_custom_call.1} parent=1 // pred_region
      %80 = dma.done [#allocation7], 384
    $region41: #{tpu_custom_call.1} parent=1 // pred_fallthru
      _
    // Predicated region
    $region42: #{tpu_custom_call.1} parent=1 // pred_check
      _
    $region43: #{tpu_custom_call.1} parent=1 // pred_check_branch
      %82 = sbr.rel (0) target = $region45
    $region44: #{tpu_custom_call.1} parent=1 // pred_region
      %84 = dma.done [#allocation10], 128
    $region45: #{tpu_custom_call.1} parent=1 // pred_fallthru
      _
    %v85 = vld [vmem:[#allocation3] sm:$0xff]
    %v86 = vld [vmem:[#allocation8] sm:$0xff]
    %v87 = vld [vmem:[#allocation8 + $0x8] sm:$0xff]
    %v88 = vld [vmem:[#allocation8 + $0x10] sm:$0xff]
    %v89 = vld [vmem:[#allocation6] sm:$0xff]
    %v90 = vld [vmem:[#allocation9] sm:$0xff]
    %vm91 = vcmask 64512
    %v93 = vsel %vm91, %v89, 0
    %95 = vmatpush.msra.mxu0 0.0
    %96 = vmatpush.msra.mxu0 0.0
    %97 = vmatpush.msra.mxu0 0.0
    %98 = vmatpush.msra.mxu0 0.0
    %99 = vmatpush.msra.mxu0 0.0
    %100 = vmatpush.msra.mxu0 0.0
    %101 = vmatpush.msra.mxu0 0.0
    %102 = vmatpush.msra.mxu0 0.0
    %103 = vmatpush.msra.mxu0 0.0
    %104 = vmatpush.msra.mxu0 0.0
    %105 = vmatpush.msra.mxu0 0.0
    %106 = vmatpush.msra.mxu0 0.0
    %107 = vmatpush.msra.mxu0 0.0
    %108 = vmatpush.msra.mxu0 0.0
    %109 = vmatpush.msra.mxu0 0.0
    %110 = vmatpush.msra.mxu0 %v90
    %111 = vmatmul.f32.gmra.mxu0 %v93
    %v112 = vpop.f32.mrf.mxu0
    %v113 = vadd.f32 0.0, %v112
    %114 = vdwg.mxu0
    %vm115 = vcmask 195584
    %v117 = vsel %vm115, %v85, 0
    %119 = vmatpush.msra.mxu0 0.0
    %120 = vmatpush.msra.mxu0 0.0
    %121 = vmatpush.msra.mxu0 0.0
    %122 = vmatpush.msra.mxu0 0.0
    %123 = vmatpush.msra.mxu0 0.0
    %124 = vmatpush.msra.mxu0 0.0
    %125 = vmatpush.msra.mxu0 0.0
    %126 = vmatpush.msra.mxu0 0.0
    %127 = vmatpush.msra.mxu0 0.0
    %128 = vmatpush.msra.mxu0 0.0
    %129 = vmatpush.msra.mxu0 0.0
    %130 = vmatpush.msra.mxu0 0.0
    %131 = vmatpush.msra.mxu0 0.0
    %132 = vmatpush.msra.mxu0 %v88
    %133 = vmatpush.msra.mxu0 %v87
    %134 = vmatpush.msra.mxu0 %v86
    %135 = vmatmul.f32.gmra.mxu0 %v117
    %v136 = vpop.f32.mrf.mxu0
    %v137 = vadd.f32 %v113, %v136
    %138 = vdwg.mxu0
    %v139 = vld [vmem:[%s4] sm:$0x1]
    %v141 = vperm.slane %v139, 0
    %v143 = vadd.f32 %v137, %v141
    %v144 = vmax.f32 %v143, 0.0
    %v145 = vld [vmem:[%s5] sm:$0x1]
    %s146 = sld [smem:[#allocation2]]
    %v147 = vstv %s146
    %148 = vmatpush.xpose.msra.mxu0 0.0
    %149 = vmatpush.xpose.msra.mxu0 0.0
    %150 = vmatpush.xpose.msra.mxu0 0.0
    %151 = vmatpush.xpose.msra.mxu0 0.0
    %152 = vmatpush.xpose.msra.mxu0 0.0
    %153 = vmatpush.xpose.msra.mxu0 0.0
    %154 = vmatpush.xpose.msra.mxu0 0.0
    %155 = vmatpush.xpose.msra.mxu0 0.0
    %156 = vmatpush.xpose.msra.mxu0 0.0
    %157 = vmatpush.xpose.msra.mxu0 0.0
    %158 = vmatpush.xpose.msra.mxu0 0.0
    %159 = vmatpush.xpose.msra.mxu0 0.0
    %160 = vmatpush.xpose.msra.mxu0 0.0
    %161 = vmatpush.xpose.msra.mxu0 0.0
    %162 = vmatpush.xpose.msra.mxu0 0.0
    %163 = vmatpush.xpose.msra.mxu0 %v144
    %164 = vmatmul.f32.gmra.mxu0 %v145
    %v165 = vpop.f32.mrf.mxu0
    %v166 = vadd.f32 %v147, %v165
    %167 = vdwg.mxu0
    %vm168 = vcmask 57344
    %169 = vst.msk [vmem:[#allocation11] sm:$0x1] %vm168, %v166
    // Predicated region
    $region46: #{tpu_custom_call.1} parent=1 // pred_check
      _
    $region47: #{tpu_custom_call.1} parent=1 // pred_check_branch
      %171 = sbr.rel (0) target = $region49
    $region48: #{tpu_custom_call.1} parent=1 // pred_region
      %173 = vsyncadd [#allocation5], 0
      %s175 = sshll.u32 [#allocation11], 4
      %s176 = int_to_ptr.vmem [resolvable:$true] %s175
      %s177 = sshll.u32 %s7, 4
      %s178 = int_to_ptr.hbm [resolvable:$true] %s177
      %180 = dma.vmem_to_hbm [thread:$0]  %s176, 16, %s178, [#allocation5]
    $region49: #{tpu_custom_call.1} parent=1 // pred_fallthru
      _
    // Predicated region
    $region50: #{tpu_custom_call.1} parent=1 // pred_check
      _
    $region51: #{tpu_custom_call.1} parent=1 // pred_check_branch
      %182 = sbr.rel (0) target = $region53
    $region52: #{tpu_custom_call.1} parent=1 // pred_region
      %184 = dma.done [#allocation5], 16
    $region53: #{tpu_custom_call.1} parent=1 // pred_fallthru
      _
    %185 = vsyncpa [#allocation4], 1
    %186 = vsyncpa [#allocation7], 1
    %187 = vsyncpa [#allocation10], 1
    %188 = vsyncpa [#allocation5], 1

</llo_original>
